<compile_context>
chip_gen: v7x
topology: tpu7x:2x2x1
jax: 0.10.0
libtpu: 0.0.40
codegen_flags: <defaults>
</compile_context>

<pallas_src>
import functools

import jax
import jax.numpy as jnp
from jax import lax
from jax.experimental import pallas as pl
from jax.experimental.pallas import tpu as pltpu

LANE = 128


def _round_up(x, m):
    return ((x + m - 1) // m) * m


def choice_kernel(x_ref, w_ref, s_ref, out_ref, *, o_pad, n_valid):
    x = x_ref[...]                                                     # (TB, D)

    # Single fused MXU matmul: y = x @ [Wf_pad | Wg_pad]; each half padded to a
    # 128-lane boundary so the split below is a lane-tile-aligned slice.
    y = jnp.dot(x, w_ref[...], preferred_element_type=jnp.float32)     # (TB, 2*o_pad)
    f = y[:, :o_pad]
    g = y[:, o_pad:]
    outs = f * g                                                       # (TB, o_pad)

    # Mask padded output columns out of the softmax.
    col = lax.broadcasted_iota(jnp.int32, outs.shape, 1)
    outs = jnp.where(col < n_valid, outs, jnp.float32(-1e30))

    m = jnp.max(outs, axis=1, keepdims=True)
    e = jnp.exp(outs - m)                                              # padded cols -> 0
    denom = jnp.sum(e, axis=1, keepdims=True)

    # Group-sum the un-normalized exponentials (10x already folded into S), then
    # normalize with the per-row scalar: commutes with the softmax normalization.
    grouped = jnp.dot(e, s_ref[...], preferred_element_type=jnp.float32)  # (TB, c_pad)
    out_ref[...] = grouped * pl.reciprocal(denom, approx=False)


def prepare_choice_params(wf, wg, n_choices, redundancy):
    """One-time parameter prep (hoisted out of the per-call path).

    wf, wg: torch-layout (out_features, in_features) = (O, D).
    Returns:
      w_cat: (D, 2*o_pad) f32 — [normalize(Wf).T | normalize(Wg).T], each half
             zero-padded from O to o_pad (multiple of 128) lanes.
      s10:   (o_pad, c_pad) f32 — group-sum matrix with the 10x factor folded in.
    """
    O, D = wf.shape
    assert O == n_choices * redundancy and wg.shape == (O, D)
    o_pad = _round_up(O, LANE)
    c_pad = _round_up(n_choices, LANE)

    def norm_rows(w):
        n = jnp.sqrt(jnp.sum(w * w, axis=1, keepdims=True))
        return w / jnp.maximum(n, 1e-12)

    wf_t = norm_rows(wf.astype(jnp.float32)).T                         # (D, O)
    wg_t = norm_rows(wg.astype(jnp.float32)).T                         # (D, O)
    w_cat = jnp.zeros((D, 2 * o_pad), jnp.float32)
    w_cat = w_cat.at[:, :O].set(wf_t)
    w_cat = w_cat.at[:, o_pad:o_pad + O].set(wg_t)

    rows = jnp.arange(o_pad)
    s10 = jnp.where(
        (rows[:, None] < O)
        & ((rows[:, None] // redundancy) == jnp.arange(c_pad)[None, :]),
        jnp.float32(10.0), jnp.float32(0.0))                           # (o_pad, c_pad)
    return w_cat, s10


@functools.partial(jax.jit, static_argnames=("n_choices", "redundancy"))
def choice_forward(x, w_cat, s10, *, n_choices, redundancy):
    """x: (B, D) activations; w_cat/s10 from prepare_choice_params (precomputed once)."""
    B, D = x.shape
    O = n_choices * redundancy
    o_pad = w_cat.shape[1] // 2
    c_pad = s10.shape[1]

    # Batch tiling: large tiles for pipelining when B grows, single tile otherwise.
    tb = 256 if B >= 256 else _round_up(B, 8)
    b_pad = _round_up(B, tb)
    x = x.astype(jnp.float32)
    if b_pad != B:
        x = jnp.pad(x, ((0, b_pad - B), (0, 0)))

    kernel = functools.partial(choice_kernel, o_pad=o_pad, n_valid=O)
    out = pl.pallas_call(
        kernel,
        out_shape=jax.ShapeDtypeStruct((b_pad, c_pad), jnp.float32),
        grid=(b_pad // tb,),
        in_specs=[
            pl.BlockSpec((tb, D), lambda i: (i, 0)),            # x tile (pipelined)
            pl.BlockSpec((D, 2 * o_pad), lambda i: (0, 0)),     # fused weights (resident)
            pl.BlockSpec((o_pad, c_pad), lambda i: (0, 0)),     # group-sum matrix (resident)
        ],
        out_specs=pl.BlockSpec((tb, c_pad), lambda i: (i, 0)),  # lane-dense output
        compiler_params=pltpu.CompilerParams(
            dimension_semantics=("parallel",)),                 # shards across TCs on v7x
    )(x, w_cat, s10)
    return out[:B, :n_choices]


def choice_reference(x, wf, wg, n_choices, redundancy):
    def norm_rows(w):
        n = jnp.sqrt(jnp.sum(w * w, axis=1, keepdims=True))
        return w / jnp.maximum(n, 1e-12)
    f = x @ norm_rows(wf).T
    g = x @ norm_rows(wg).T
    outs = f * g
    p = jax.nn.softmax(outs, axis=1)
    B = x.shape[0]
    return jnp.sum(10.0 * p.reshape(B, n_choices, redundancy), axis=2)


if __name__ == "__main__":
    # Module hyperparameters (small, consistent with the file: VEC_SIZE = 2**4 = 16)
    vec_size = 16
    n_vecs = 2
    n_choices = 4
    redundancy = 8
    batch = 8

    D = vec_size * n_vecs
    O = n_choices * redundancy

    key = jax.random.PRNGKey(0)
    k_a, k_b, k_wf, k_wg = jax.random.split(key, 4)

    # inp is a tuple of n_vecs tensors, each (B, vec_size); Vecs = hstack
    inp_a = jax.random.normal(k_a, (batch, vec_size), dtype=jnp.float32)
    inp_b = jax.random.normal(k_b, (batch, vec_size), dtype=jnp.float32)
    x = jnp.concatenate([inp_a, inp_b], axis=1)                        # (B, D)  (torch.hstack)

    # NormalizedLinear weights, torch layout (out_features, in_features)
    wf = jax.random.normal(k_wf, (O, D), dtype=jnp.float32) * 0.1
    wg = jax.random.normal(k_wg, (O, D), dtype=jnp.float32) * 0.1

    # One-time parameter prep (not in the per-call path).
    w_cat, s10 = prepare_choice_params(wf, wg, n_choices, redundancy)
    w_cat, s10 = jax.block_until_ready((w_cat, s10))

    out = choice_forward(x, w_cat, s10, n_choices=n_choices, redundancy=redundancy)
    out = jax.block_until_ready(out)

    ref = choice_reference(x, wf, wg, n_choices, redundancy)
    assert out.shape == (batch, n_choices)
    assert jnp.allclose(out, ref, atol=1e-4, rtol=1e-4), (out, ref)

    print("KERNEL_OK")
</pallas_src>

<mosaic_0001>
module attributes {stable_mosaic.version = 11 : i64} {
  func.func @choice_kernel(%arg0: i32, %arg1: memref<8x32xf32, #tpu.memory_space<vmem>>, %arg2: memref<32x256xf32, #tpu.memory_space<vmem>>, %arg3: memref<128x128xf32, #tpu.memory_space<vmem>>, %arg4: memref<8x128xf32, #tpu.memory_space<vmem>>) attributes {dimension_semantics = [#tpu.dimension_semantics<parallel>], iteration_bounds = array<i64: 1>, scalar_prefetch = 0 : i64, scratch_operands = 0 : i64, tpu.core_type = #tpu.core_type<tc>, window_params = [{transform_indices = @transform_0, window_bounds = array<i64: 8, 32>}, {pipeline_mode = #tpu.pipeline_mode<synchronous>, transform_indices = @transform_1, window_bounds = array<i64: 32, 256>}, {pipeline_mode = #tpu.pipeline_mode<synchronous>, transform_indices = @transform_2, window_bounds = array<i64: 128, 128>}, {transform_indices = @transform_3, window_bounds = array<i64: 8, 128>}]} {
    %c0 = arith.constant 0 : index
    %c0_0 = arith.constant 0 : index
    %0 = vector.load %arg1[%c0, %c0_0] : memref<8x32xf32, #tpu.memory_space<vmem>>, vector<8x32xf32>
    %c0_1 = arith.constant 0 : index
    %c0_2 = arith.constant 0 : index
    %1 = vector.load %arg2[%c0_1, %c0_2] : memref<32x256xf32, #tpu.memory_space<vmem>>, vector<32x256xf32>
    %cst = arith.constant dense<0.000000e+00> : vector<8x256xf32>
    %2 = tpu.matmul %0, %1, %cst {dimension_numbers = #tpu.dot_dimension_numbers<[1], [0], [0], [1], [0, 0, 1, 1], [], []>} : vector<8x32xf32>, vector<32x256xf32>, vector<8x256xf32> -> vector<8x256xf32>
    %3 = vector.extract_strided_slice %2 {offsets = [0, 0], sizes = [8, 128], strides = [1, 1]} : vector<8x256xf32> to vector<8x128xf32>
    %4 = vector.extract_strided_slice %2 {offsets = [0, 128], sizes = [8, 128], strides = [1, 1]} : vector<8x256xf32> to vector<8x128xf32>
    %5 = arith.mulf %3, %4 : vector<8x128xf32>
    %6 = tpu.iota {dimensions = array<i32: 1>} : vector<8x128xi32>
    %c32_i32 = arith.constant 32 : i32
    %7 = vector.broadcast %c32_i32 : i32 to vector<8x128xi32>
    %8 = arith.cmpi slt, %6, %7 : vector<8x128xi32>
    %cst_3 = arith.constant -1.000000e+30 : f32
    %9 = vector.broadcast %cst_3 : f32 to vector<8x128xf32>
    %10 = arith.select %8, %5, %9 : vector<8x128xi1>, vector<8x128xf32>
    %cst_4 = arith.constant dense<0xFF800000> : vector<8xf32>
    %11 = vector.multi_reduction <maximumf>, %10, %cst_4 [1] : vector<8x128xf32> to vector<8xf32>
    %12 = vector.shape_cast %11 : vector<8xf32> to vector<8x1xf32>
    %13 = vector.broadcast %12 : vector<8x1xf32> to vector<8x128xf32>
    %14 = arith.subf %10, %13 : vector<8x128xf32>
    %15 = math.exp %14 : vector<8x128xf32>
    %cst_5 = arith.constant dense<0.000000e+00> : vector<8xf32>
    %16 = vector.multi_reduction <add>, %15, %cst_5 [1] : vector<8x128xf32> to vector<8xf32>
    %17 = vector.shape_cast %16 : vector<8xf32> to vector<8x1xf32>
    %c0_6 = arith.constant 0 : index
    %c0_7 = arith.constant 0 : index
    %18 = vector.load %arg3[%c0_6, %c0_7] : memref<128x128xf32, #tpu.memory_space<vmem>>, vector<128x128xf32>
    %cst_8 = arith.constant dense<0.000000e+00> : vector<8x128xf32>
    %19 = tpu.matmul %15, %18, %cst_8 {dimension_numbers = #tpu.dot_dimension_numbers<[1], [0], [0], [1], [0, 0, 1, 1], [], []>} : vector<8x128xf32>, vector<128x128xf32>, vector<8x128xf32> -> vector<8x128xf32>
    %20 = tpu.reciprocal %17 : vector<8x1xf32> -> vector<8x1xf32>
    %21 = vector.broadcast %20 : vector<8x1xf32> to vector<8x128xf32>
    %22 = arith.mulf %19, %21 : vector<8x128xf32>
    %c0_9 = arith.constant 0 : index
    %c0_10 = arith.constant 0 : index
    %23 = vector.load %arg4[%c0_9, %c0_10] : memref<8x128xf32, #tpu.memory_space<vmem>>, vector<8x128xf32>
    tpu.vector_store %arg4[%c0_9, %c0_10], %22 {strides = array<i32>} : memref<8x128xf32, #tpu.memory_space<vmem>>, vector<8x128xf32>,
    return
  }
  func.func @transform_0(%arg0: i32) -> (i32, i32) {
    %c0_i32 = arith.constant 0 : i32
    %c0_i32_0 = arith.constant 0 : i32
    return %arg0, %c0_i32 : i32, i32
  }
  func.func @transform_1(%arg0: i32) -> (i32, i32) {
    %c0_i32 = arith.constant 0 : i32
    %c0_i32_0 = arith.constant 0 : i32
    %c0_i32_1 = arith.constant 0 : i32
    return %c0_i32, %c0_i32_0 : i32, i32
  }
  func.func @transform_2(%arg0: i32) -> (i32, i32) {
    %c0_i32 = arith.constant 0 : i32
    %c0_i32_0 = arith.constant 0 : i32
    %c0_i32_1 = arith.constant 0 : i32
    return %c0_i32, %c0_i32_0 : i32, i32
  }
  func.func @transform_3(%arg0: i32) -> (i32, i32) {
    %c0_i32 = arith.constant 0 : i32
    %c0_i32_0 = arith.constant 0 : i32
    return %arg0, %c0_i32 : i32, i32
  }
}

</mosaic_0001>

<llo_original>
// kernel: choice_forward.1
$region0: #{choice_forward.1}
  #allocation0 [shape = 'u32[]', space=smem, size = 0x4, offset = 0x4, fixed_abs, tag = 'smem constant byte address 0x4 - core index']
  #allocation1 [shape = 'u32[144,128]{1,0:T(1,128)}', space=vmem, size = 0x12000, scoped, tag = 'internal scratch']
  %s0 = inlined_call_operand.hbm [shape: f32[8,32], index: 0, kind: input, shape index: {}]
  %s1 = inlined_call_operand.hbm [shape: f32[32,256], index: 1, kind: input, shape index: {}]
  %s2 = inlined_call_operand.hbm [shape: f32[128,128], index: 2, kind: input, shape index: {}]
  %s3 = inlined_call_operand.vmem [shape: f32[8,128], index: 3, kind: output, shape index: {}]
  %s4 = sld [smem:[#allocation0]]
  $region34: #{choice_forward.1} parent=0
    _
  %s6 = ssub.s32 1, %s4
  %s7 = scalar_select 0, %s6, %s4
  $region1: #{choice_forward.1} parent=0
    #allocation2 [shape = 'u8[4096]{0}', space=vmem, size = 0x1000, scoped, tag = 'input window, operand 0, single buffered']
    #allocation3 [shape = 's32[1]{0}', space=sflag, size = 0x4, scoped, tag = 'scoped memory for choice_forward.1']
    #allocation4 [shape = 'u8[32768]{0}', space=vmem, size = 0x8000, scoped, tag = 'input window, operand 1, single buffered']
    #allocation5 [shape = 's32[1]{0}', space=sflag, size = 0x4, scoped, tag = 'scoped memory for choice_forward.1']
    #allocation6 [shape = 'u8[65536]{0}', space=vmem, size = 0x10000, scoped, tag = 'input window, operand 2, single buffered']
    %8 = vsyncpa [#allocation3], 0
    %9 = vsyncpa [#allocation5], 0
    // Predicated region
    $region2: #{choice_forward.1} parent=1 // pred_check
      _
    $region3: #{choice_forward.1} parent=1 // pred_check_branch
      %11 = sbr.rel (0) target = $region5
    $region4: #{choice_forward.1} parent=1 // pred_region
      %s13 = ssub.s32 128, 128
      %14 = vsyncadd [#allocation3], %s13
      %s16 = sshll.u32 [#allocation2], 4
      %s17 = int_to_ptr.vmem [resolvable:$true] %s16
      %19 = dma.hbm_to_vmem [thread:$0]  %s0, 128, %s17, [#allocation3]
    $region5: #{choice_forward.1} parent=1 // pred_fallthru
      _
    // Predicated region
    $region6: #{choice_forward.1} parent=1 // pred_check
      _
    $region7: #{choice_forward.1} parent=1 // pred_check_branch
      %21 = sbr.rel (0) target = $region9
    $region8: #{choice_forward.1} parent=1 // pred_region
      %s23 = ssub.s32 1024, 1024
      %24 = vsyncadd [#allocation5], %s23
      %s25 = sshll.u32 [#allocation4], 4
      %s26 = int_to_ptr.vmem [resolvable:$true] %s25
      %31 = dma.hbm_to_vmem [thread:$0]  %s1, 1024, %s26, [#allocation5], 256, 256, 16
    $region9: #{choice_forward.1} parent=1 // pred_fallthru
      _
    // Predicated region
    $region10: #{choice_forward.1} parent=1 // pred_check
      _
    $region11: #{choice_forward.1} parent=1 // pred_check_branch
      %33 = sbr.rel (0) target = $region13
    $region12: #{choice_forward.1} parent=1 // pred_region
      %s35 = ssub.s32 2048, 2048
      %36 = vsyncadd [#allocation5], %s35
      %s37 = sshll.u32 [#allocation6], 4
      %s38 = int_to_ptr.vmem [resolvable:$true] %s37
      %43 = dma.hbm_to_vmem [thread:$0]  %s2, 2048, %s38, [#allocation5], 128, 128, 8
    $region13: #{choice_forward.1} parent=1 // pred_fallthru
      _
    // Predicated region
    $region14: #{choice_forward.1} parent=1 // pred_check
      _
    $region15: #{choice_forward.1} parent=1 // pred_check_branch
      %45 = sbr.rel (0) target = $region17
    $region16: #{choice_forward.1} parent=1 // pred_region
      %46 = dma.done [#allocation3], 128
    $region17: #{choice_forward.1} parent=1 // pred_fallthru
      _
    // Predicated region
    $region18: #{choice_forward.1} parent=1 // pred_check
      _
    $region19: #{choice_forward.1} parent=1 // pred_check_branch
      %48 = sbr.rel (0) target = $region21
    $region20: #{choice_forward.1} parent=1 // pred_region
      %49 = dma.done [#allocation5], 1024
    $region21: #{choice_forward.1} parent=1 // pred_fallthru
      _
    // Predicated region
    $region22: #{choice_forward.1} parent=1 // pred_check
      _
    $region23: #{choice_forward.1} parent=1 // pred_check_branch
      %51 = sbr.rel (0) target = $region25
    $region24: #{choice_forward.1} parent=1 // pred_region
      %52 = dma.done [#allocation5], 2048
    $region25: #{choice_forward.1} parent=1 // pred_fallthru
      _
    %v53 = vld [vmem:[#allocation2] sm:$0xff]
    %v54 = vld [vmem:[#allocation4] sm:$0xff]
    %v55 = vld [vmem:[#allocation4 + $0x8] sm:$0xff]
    %v56 = vld [vmem:[#allocation4 + $0x10] sm:$0xff]
    %v57 = vld [vmem:[#allocation4 + $0x18] sm:$0xff]
    %v58 = vld [vmem:[#allocation4 + $0x20] sm:$0xff]
    %v59 = vld [vmem:[#allocation4 + $0x28] sm:$0xff]
    %v60 = vld [vmem:[#allocation4 + $0x30] sm:$0xff]
    %v61 = vld [vmem:[#allocation4 + $0x38] sm:$0xff]
    %vm62 = vcmask 261120
    %v64 = vsel %vm62, %v53, 0
    %66 = vmatprep.subr.mxu0 %v55
    %67 = vmatpush1.msra.mxu0 %v54
    %68 = vmatprep.subr.mxu0 %v57
    %69 = vmatpush1.msra.mxu0 %v56
    %70 = vmatprep.subr.mxu0 %v59
    %71 = vmatpush1.msra.mxu0 %v58
    %72 = vmatprep.subr.mxu0 %v61
    %73 = vmatpush1.msra.mxu0 %v60
    %74 = vmatprep.subr.mxu0 0.0
    %75 = vmatpush1.msra.mxu0 0.0
    %76 = vmatprep.subr.mxu0 0.0
    %77 = vmatpush1.msra.mxu0 0.0
    %78 = vmatprep.subr.mxu0 0.0
    %79 = vmatpush1.msra.mxu0 0.0
    %80 = vmatprep.subr.mxu0 0.0
    %81 = vmatpush1.msra.mxu0 0.0
    %82 = vmatprep.subr.mxu0 0.0
    %83 = vmatpush1.msra.mxu0 0.0
    %84 = vmatprep.subr.mxu0 0.0
    %85 = vmatpush1.msra.mxu0 0.0
    %86 = vmatprep.subr.mxu0 0.0
    %87 = vmatpush1.msra.mxu0 0.0
    %88 = vmatprep.subr.mxu0 0.0
    %89 = vmatpush1.msra.mxu0 0.0
    %90 = vmatprep.subr.mxu0 0.0
    %91 = vmatpush1.msra.mxu0 0.0
    %92 = vmatprep.subr.mxu0 0.0
    %93 = vmatpush1.msra.mxu0 0.0
    %94 = vmatprep.subr.mxu0 0.0
    %95 = vmatpush1.msra.mxu0 0.0
    %96 = vmatprep.subr.mxu0 0.0
    %97 = vmatpush1.msra.mxu0 0.0
    %98 = vmatprep.subr.mxu0 0.0
    %99 = vmatpush1.msra.mxu0 0.0
    %100 = vmatprep.subr.mxu0 0.0
    %101 = vmatpush1.msra.mxu0 0.0
    %102 = vmatprep.subr.mxu0 0.0
    %103 = vmatpush1.msra.mxu0 0.0
    %104 = vmatprep.subr.mxu0 0.0
    %105 = vmatpush1.msra.mxu0 0.0
    %106 = vmatprep.subr.mxu0 0.0
    %107 = vmatpush1.msra.mxu0 0.0
    %108 = vmatprep.subr.mxu0 0.0
    %109 = vmatpush1.msra.mxu0 0.0
    %110 = vmatprep.subr.mxu0 0.0
    %111 = vmatpush1.msra.mxu0 0.0
    %112 = vmatprep.subr.mxu0 0.0
    %113 = vmatpush1.msra.mxu0 0.0
    %114 = vmatprep.subr.mxu0 0.0
    %115 = vmatpush1.msra.mxu0 0.0
    %116 = vmatprep.subr.mxu0 0.0
    %117 = vmatpush1.msra.mxu0 0.0
    %118 = vmatprep.subr.mxu0 0.0
    %119 = vmatpush1.msra.mxu0 0.0
    %120 = vmatprep.subr.mxu0 0.0
    %121 = vmatpush1.msra.mxu0 0.0
    %122 = vmatprep.subr.mxu0 0.0
    %123 = vmatpush1.msra.mxu0 0.0
    %124 = vmatprep.subr.mxu0 0.0
    %125 = vmatpush1.msra.mxu0 0.0
    %126 = vmatprep.subr.mxu0 0.0
    %127 = vmatpush1.msra.mxu0 0.0
    %128 = vmatprep.subr.mxu0 0.0
    %129 = vmatpush1.msra.mxu0 0.0
    %130 = vmatprep.mubr.f32.mxu0 0.0
    %131 = vmatmul.mubr.f32.gmra.mrb[0].mxu0 %v64
    %v132 = vpop.f32.mrb[0].mxu0
    %v133 = vadd.f32 0.0, %v132
    %v134 = vpop.f32.mrb[0].mxu0
    %v135 = vadd.f32 0.0, %v134
    %136 = vdwg.mxu0
    %v137 = vmul.f32 %v133, %v135
    %v138 = vlaneseq
    %v139 = vand.u32 %v138, 127
    %vm140 = vcmp.lt.s32.totalorder %v139, 32
    %v141 = vsel %vm140, %v137, -1e+30
    %142 = vmax.xlane.f32.xlu0 %v141
    %v143 = vpop.xlane.xlu0 %142
    %v144 = vsub.f32 %v141, %v143
    %v145 = vmul.f32 %v144, 1.442695
    %v146 = vpow.pop %v145
    %147 = vadd.xlane.f32.xlu0 %v146
    %v148 = vpop.xlane.xlu0 %147
    %v149 = vld [vmem:[#allocation6] sm:$0xff]
    %v150 = vld [vmem:[#allocation6 + $0x8] sm:$0xff]
    %v151 = vld [vmem:[#allocation6 + $0x10] sm:$0xff]
    %v152 = vld [vmem:[#allocation6 + $0x18] sm:$0xff]
    %v153 = vld [vmem:[#allocation6 + $0x20] sm:$0xff]
    %v154 = vld [vmem:[#allocation6 + $0x28] sm:$0xff]
    %v155 = vld [vmem:[#allocation6 + $0x30] sm:$0xff]
    %v156 = vld [vmem:[#allocation6 + $0x38] sm:$0xff]
    %v157 = vld [vmem:[#allocation6 + $0x40] sm:$0xff]
    %v158 = vld [vmem:[#allocation6 + $0x48] sm:$0xff]
    %v159 = vld [vmem:[#allocation6 + $0x50] sm:$0xff]
    %v160 = vld [vmem:[#allocation6 + $0x58] sm:$0xff]
    %v161 = vld [vmem:[#allocation6 + $0x60] sm:$0xff]
    %v162 = vld [vmem:[#allocation6 + $0x68] sm:$0xff]
    %v163 = vld [vmem:[#allocation6 + $0x70] sm:$0xff]
    %v164 = vld [vmem:[#allocation6 + $0x78] sm:$0xff]
    %165 = vmatprep.subr.mxu0 0.0
    %166 = vmatpush1.msra.mxu0 %v149
    %167 = vmatprep.subr.mxu0 0.0
    %168 = vmatpush1.msra.mxu0 %v150
    %169 = vmatprep.subr.mxu0 0.0
    %170 = vmatpush1.msra.mxu0 %v151
    %171 = vmatprep.subr.mxu0 0.0
    %172 = vmatpush1.msra.mxu0 %v152
    %173 = vmatprep.subr.mxu0 0.0
    %174 = vmatpush1.msra.mxu0 %v153
    %175 = vmatprep.subr.mxu0 0.0
    %176 = vmatpush1.msra.mxu0 %v154
    %177 = vmatprep.subr.mxu0 0.0
    %178 = vmatpush1.msra.mxu0 %v155
    %179 = vmatprep.subr.mxu0 0.0
    %180 = vmatpush1.msra.mxu0 %v156
    %181 = vmatprep.subr.mxu0 0.0
    %182 = vmatpush1.msra.mxu0 %v157
    %183 = vmatprep.subr.mxu0 0.0
    %184 = vmatpush1.msra.mxu0 %v158
    %185 = vmatprep.subr.mxu0 0.0
    %186 = vmatpush1.msra.mxu0 %v159
    %187 = vmatprep.subr.mxu0 0.0
    %188 = vmatpush1.msra.mxu0 %v160
    %189 = vmatprep.subr.mxu0 0.0
    %190 = vmatpush1.msra.mxu0 %v161
    %191 = vmatprep.subr.mxu0 0.0
    %192 = vmatpush1.msra.mxu0 %v162
    %193 = vmatprep.subr.mxu0 0.0
    %194 = vmatpush1.msra.mxu0 %v163
    %195 = vmatprep.subr.mxu0 0.0
    %196 = vmatpush1.msra.mxu0 %v164
    %197 = vmatprep.subr.mxu0 0.0
    %198 = vmatpush1.msra.mxu0 0.0
    %199 = vmatprep.subr.mxu0 0.0
    %200 = vmatpush1.msra.mxu0 0.0
    %201 = vmatprep.subr.mxu0 0.0
    %202 = vmatpush1.msra.mxu0 0.0
    %203 = vmatprep.subr.mxu0 0.0
    %204 = vmatpush1.msra.mxu0 0.0
    %205 = vmatprep.subr.mxu0 0.0
    %206 = vmatpush1.msra.mxu0 0.0
    %207 = vmatprep.subr.mxu0 0.0
    %208 = vmatpush1.msra.mxu0 0.0
    %209 = vmatprep.subr.mxu0 0.0
    %210 = vmatpush1.msra.mxu0 0.0
    %211 = vmatprep.subr.mxu0 0.0
    %212 = vmatpush1.msra.mxu0 0.0
    %213 = vmatprep.subr.mxu0 0.0
    %214 = vmatpush1.msra.mxu0 0.0
    %215 = vmatprep.subr.mxu0 0.0
    %216 = vmatpush1.msra.mxu0 0.0
    %217 = vmatprep.subr.mxu0 0.0
    %218 = vmatpush1.msra.mxu0 0.0
    %219 = vmatprep.subr.mxu0 0.0
    %220 = vmatpush1.msra.mxu0 0.0
    %221 = vmatprep.subr.mxu0 0.0
    %222 = vmatpush1.msra.mxu0 0.0
    %223 = vmatprep.subr.mxu0 0.0
    %224 = vmatpush1.msra.mxu0 0.0
    %225 = vmatprep.subr.mxu0 0.0
    %226 = vmatpush1.msra.mxu0 0.0
    %227 = vmatprep.subr.mxu0 0.0
    %228 = vmatpush1.msra.mxu0 0.0
    %229 = vmatprep.mubr.f32.mxu0 0.0
    %230 = vmatmul.mubr.f32.gmra.mrb[0].mxu0 %v146
    %v231 = vpop.f32.mrb[0].mxu0
    %v232 = vadd.f32 0.0, %v231
    %v233 = vpop.f32.mrb[0].mxu0
    %234 = vdwg.mxu0
    %v235 = vrcp.pop %v148
    %v236 = vmul.f32 %v232, %v235
    %237 = vst [vmem:[%s3] sm:$0xff] %v236
    // Predicated region
    $region26: #{choice_forward.1} parent=1 // pred_check
      _
    $region27: #{choice_forward.1} parent=1 // pred_check_branch
      %239 = sbr.rel (0) target = $region29
    $region28: #{choice_forward.1} parent=1 // pred_region
      _
    $region29: #{choice_forward.1} parent=1 // pred_fallthru
      _
    // Predicated region
    $region30: #{choice_forward.1} parent=1 // pred_check
      _
    $region31: #{choice_forward.1} parent=1 // pred_check_branch
      %241 = sbr.rel (0) target = $region33
    $region32: #{choice_forward.1} parent=1 // pred_region
      _
    $region33: #{choice_forward.1} parent=1 // pred_fallthru
      _
    %242 = vsyncpa [#allocation3], 1
    %243 = vsyncpa [#allocation5], 1

</llo_original>
